<compile_context>
chip_gen: v5e
topology: v5e:2x2
jax: 0.10.0
libtpu: 0.0.40
codegen_flags: <defaults>
</compile_context>

<pallas_src>
import jax
import jax.numpy as jnp
from jax.experimental import pallas as pl
from jax.experimental.pallas import tpu as pltpu

_LANES = 128
_SUBLANES = 8


def _round_up(x, m):
    return ((x + m - 1) // m) * m


def _cdiv(a, b):
    return -(-a // b)


def _vmem_limit_bytes():
    """Scoped-VMEM budget: ~3/4 of physical (v5e/v6e -> ~96 MiB, v7x -> ~48 MiB)."""
    try:
        cap = int(pltpu.get_tpu_info().vmem_capacity_bytes)
    except Exception:
        cap = 64 * 1024 * 1024  # conservative fallback (v7x per-TC physical)
    return int(min(cap * 3 // 4, 100 * 1024 * 1024))


def _choose_tile_b(batch, d, itemsize, vmem_limit):
    """Rows per grid step (multiple of 8), sized by the lane-padded VMEM bytes of one x tile."""
    target_x_tile_bytes = max(4 * 1024 * 1024, min(16 * 1024 * 1024, vmem_limit // 4))
    d_pad = _round_up(max(int(d), 1), _LANES)            # lane-padded VMEM row width
    bytes_per_row = int(itemsize) * d_pad
    rows_by_bytes = max(_SUBLANES,
                        (target_x_tile_bytes // bytes_per_row) // _SUBLANES * _SUBLANES)
    # Keep >= 2 (and even) grid steps so megacore / v7x's second TensorCore gets work.
    n_tiles = max(2, _cdiv(batch, rows_by_bytes))
    if n_tiles % 2:
        n_tiles += 1
    rows = _round_up(_cdiv(batch, n_tiles), _SUBLANES)
    return int(max(_SUBLANES, min(rows, rows_by_bytes)))


def _infer_kernel(x_ref, w_ref, b_ref, pred_ref):
    # x_ref: (tile_b, D) VMEM (native dtype); w_ref: (8, D) VMEM f32 (row 0 = real weight);
    # b_ref: (1, 1) SMEM f32; pred_ref: (1, 1, tile_b) VMEM f32 (lane-dense slab).
    x = x_ref[...].astype(jnp.float32)
    w = w_ref[...]
    # Batch lands on lanes: (8, D) . (tile_b, D)^T -> (8, tile_b) on the MXU
    # (same rhs-minor-dim contraction pattern as attention's Q @ K^T).
    logits = jax.lax.dot_general(
        w, x, dimension_numbers=(((1,), (1,)), ((), ())),
        preferred_element_type=jnp.float32)
    probs = jax.nn.sigmoid(logits[0:1, :] + b_ref[0, 0])          # (1, tile_b)
    pred_ref[0] = probs.astype(pred_ref.dtype)


def _train_kernel(x_ref, y_ref, w_ref, b_ref, nvalid_ref, loss_ref):
    # loss_ref: (1, 1, 128) block of the per-tile partial squared-error-sum output.
    tile_b = x_ref.shape[0]
    x = x_ref[...].astype(jnp.float32)
    w = w_ref[0:1, :]                                              # real weight row (1, D)
    logits = jnp.sum(x * w, axis=-1, keepdims=True) + b_ref[0, 0]  # (tile_b, 1)
    y_pred = jax.nn.sigmoid(logits)
    diff = y_pred - y_ref[...].astype(jnp.float32)
    # Mask rows past the true batch (covers the partial final block: no wrapper-side pad).
    row = (jax.lax.broadcasted_iota(jnp.int32, (tile_b, 1), 0)
           + pl.program_id(0) * tile_b)
    sq = jnp.where(row < nvalid_ref[0, 0], diff * diff, 0.0)       # (tile_b, 1)
    partial = jnp.sum(sq, axis=0, keepdims=True)                   # (1, 1)
    # Lane-dense, unmasked store of the per-tile partial sum (mean finished in wrapper).
    loss_ref[0] = jnp.broadcast_to(partial, (1, _LANES))


def torch_model_forward(x, weight, bias, y=None, *, tile_b=None):
    """Replicates TorchModel.forward.

    x:      [B, D]          weight: [1, D] (torch nn.Linear(input_size, 1).weight)
    bias:   [1]             y: optional [B, 1] targets.
    Returns sigmoid(x @ weight.T + bias) of shape [B, 1] if y is None, else scalar MSE loss.
    """
    B, D = x.shape
    vmem_limit = _vmem_limit_bytes()
    if tile_b is None:
        tile_b = _choose_tile_b(B, D, x.dtype.itemsize, vmem_limit)
    assert tile_b % _SUBLANES == 0, "tile_b must be a multiple of 8 (sublane tiling)"
    num_tiles = _cdiv(B, tile_b)

    # Weight stays lane-major; zero-pad to 8 rows so the MXU output has a full sublane tile.
    w_row = weight.reshape(1, D).astype(jnp.float32)
    w_pad = jnp.pad(w_row, ((0, _SUBLANES - 1), (0, 0)))
    b_smem = bias.reshape(1, 1).astype(jnp.float32)

    params = pltpu.CompilerParams(
        dimension_semantics=("parallel",),                  # batch tiles shard across TCs
        vmem_limit_bytes=vmem_limit,
    )

    x_spec = pl.BlockSpec((tile_b, D), lambda i: (i, 0))
    w_spec = pl.BlockSpec((_SUBLANES, D), lambda i: (0, 0))
    b_spec = pl.BlockSpec((1, 1), lambda i: (0, 0), memory_space=pltpu.SMEM)

    if y is None:
        # Inference path: no targets DMA'd, no loss math, lane-dense per-tile pred slabs.
        pred_tiles = pl.pallas_call(
            _infer_kernel,
            grid=(num_tiles,),
            in_specs=[x_spec, w_spec, b_spec],
            out_specs=pl.BlockSpec((1, 1, tile_b), lambda i: (i, 0, 0)),
            out_shape=jax.ShapeDtypeStruct((num_tiles, 1, tile_b), jnp.float32),
            compiler_params=params,
        )(x, w_pad, b_smem)
        # Contiguous reshape back to a column; rows past B (partial last tile) are dropped.
        return pred_tiles.reshape(num_tiles * tile_b, 1)[:B]

    # Training path: per-tile partial squared-error sums, mean finished here.
    y_col = y.astype(jnp.float32).reshape(B, 1)
    n_valid = jnp.full((1, 1), B, dtype=jnp.int32)

    partials = pl.pallas_call(
        _train_kernel,
        grid=(num_tiles,),
        in_specs=[
            x_spec,
            pl.BlockSpec((tile_b, 1), lambda i: (i, 0)),                      # y targets
            w_spec,
            b_spec,
            pl.BlockSpec((1, 1), lambda i: (0, 0), memory_space=pltpu.SMEM),  # n_valid
        ],
        out_specs=pl.BlockSpec((1, 1, _LANES), lambda i: (i, 0, 0)),
        out_shape=jax.ShapeDtypeStruct((num_tiles, 1, _LANES), jnp.float32),
        compiler_params=params,
    )(x, y_col, w_pad, b_smem, n_valid)

    return jnp.sum(partials[:, 0, 0]) / B


if __name__ == "__main__":
    key = jax.random.PRNGKey(0)
    k_x, k_w, k_b = jax.random.split(key, 3)

    B, D = 20, 32                       # batch=20, input_size=32 (exercises partial tiles)
    x = jax.random.normal(k_x, (B, D), dtype=jnp.float32)
    weight = jax.random.normal(k_w, (1, D), dtype=jnp.float32) * 0.1   # torch Linear weight (1, D)
    bias = jax.random.normal(k_b, (1,), dtype=jnp.float32) * 0.1       # torch Linear bias (1,)

    # Synthetic rule ("找数字规律"): label = 1 if x[:, 0] > x[:, -1] else 0
    y = (x[:, 0] > x[:, -1]).astype(jnp.float32).reshape(B, 1)

    # Inference: explicit tile (3 tiles of 8 rows, partial last tile with 4 OOB rows).
    y_pred = torch_model_forward(x, weight, bias, tile_b=8)
    jax.block_until_ready(y_pred)
    # Inference: auto tile (>= 2 tiles for megacore; 2 tiles of 16 rows, partial last tile).
    y_pred_auto = torch_model_forward(x, weight, bias)
    jax.block_until_ready(y_pred_auto)

    # Training: scalar MSE loss with OOB rows of the partial final block masked out.
    loss = torch_model_forward(x, weight, bias, y, tile_b=8)
    jax.block_until_ready(loss)
    loss_auto = torch_model_forward(x, weight, bias, y)
    jax.block_until_ready(loss_auto)

    # Cross-check against plain JAX reference.
    ref_pred = jax.nn.sigmoid(x @ weight.T + bias)
    ref_loss = jnp.mean((ref_pred - y) ** 2)
    assert y_pred.shape == (B, 1)
    assert jnp.allclose(y_pred, ref_pred, atol=1e-5), "y_pred mismatch"
    assert jnp.allclose(y_pred_auto, ref_pred, atol=1e-5), "y_pred (auto tile) mismatch"
    assert abs(float(loss) - float(ref_loss)) < 1e-5, "loss mismatch"
    assert abs(float(loss_auto) - float(ref_loss)) < 1e-5, "loss (auto tile) mismatch"

    print("KERNEL_OK")
</pallas_src>

<mosaic_0001>
module attributes {stable_mosaic.version = 11 : i64} {
  func.func @_infer_kernel(%arg0: i32, %arg1: memref<8x32xf32, #tpu.memory_space<vmem>>, %arg2: memref<8x32xf32, #tpu.memory_space<vmem>>, %arg3: memref<1x1xf32, #tpu.memory_space<smem>>, %arg4: memref<1x1x8xf32, #tpu.memory_space<vmem>>) attributes {dimension_semantics = [#tpu.dimension_semantics<parallel>], iteration_bounds = array<i64: 3>, scalar_prefetch = 0 : i64, scratch_operands = 0 : i64, tpu.core_type = #tpu.core_type<tc>, window_params = [{transform_indices = @transform_0, window_bounds = array<i64: 8, 32>}, {pipeline_mode = #tpu.pipeline_mode<synchronous>, transform_indices = @transform_1, window_bounds = array<i64: 8, 32>}, {transform_indices = @transform_2, window_bounds = array<i64: 1, 1>}, {transform_indices = @transform_3, window_bounds = array<i64: 1, 1, 8>}]} {
    %c0 = arith.constant 0 : index
    %c0_0 = arith.constant 0 : index
    %0 = vector.load %arg1[%c0, %c0_0] : memref<8x32xf32, #tpu.memory_space<vmem>>, vector<8x32xf32>
    %c0_1 = arith.constant 0 : index
    %c0_2 = arith.constant 0 : index
    %1 = vector.load %arg2[%c0_1, %c0_2] : memref<8x32xf32, #tpu.memory_space<vmem>>, vector<8x32xf32>
    %cst = arith.constant dense<0.000000e+00> : vector<8x8xf32>
    %2 = tpu.matmul %1, %0, %cst {dimension_numbers = #tpu.dot_dimension_numbers<[1], [1], [0], [0], [0, 0, 1, 0], [], []>} : vector<8x32xf32>, vector<8x32xf32>, vector<8x8xf32> -> vector<8x8xf32>
    %3 = vector.extract_strided_slice %2 {offsets = [0, 0], sizes = [1, 8], strides = [1, 1]} : vector<8x8xf32> to vector<1x8xf32>
    %c0_3 = arith.constant 0 : index
    %c0_4 = arith.constant 0 : index
    %4 = memref.load %arg3[%c0_3, %c0_4] : memref<1x1xf32, #tpu.memory_space<smem>>
    %5 = vector.broadcast %4 : f32 to vector<1x8xf32>
    %6 = arith.addf %3, %5 : vector<1x8xf32>
    %7 = arith.negf %6 : vector<1x8xf32>
    %8 = math.exp %7 : vector<1x8xf32>
    %cst_5 = arith.constant 1.000000e+00 : f32
    %9 = vector.broadcast %cst_5 : f32 to vector<1x8xf32>
    %10 = arith.addf %9, %8 : vector<1x8xf32>
    %11 = arith.divf %9, %10 : vector<1x8xf32>
    %c0_6 = arith.constant 0 : index
    %c0_7 = arith.constant 0 : index
    %c0_8 = arith.constant 0 : index
    %12 = vector.load %arg4[%c0_6, %c0_7, %c0_8] : memref<1x1x8xf32, #tpu.memory_space<vmem>>, vector<1x1x8xf32>
    %13 = vector.shape_cast %12 : vector<1x1x8xf32> to vector<1x8xf32>
    %14 = vector.shape_cast %11 : vector<1x8xf32> to vector<1x1x8xf32>
    tpu.vector_store %arg4[%c0_6, %c0_7, %c0_8], %14 {strides = array<i32>} : memref<1x1x8xf32, #tpu.memory_space<vmem>>, vector<1x1x8xf32>,
    return
  }
  func.func @transform_0(%arg0: i32) -> (i32, i32) {
    %c0_i32 = arith.constant 0 : i32
    %c0_i32_0 = arith.constant 0 : i32
    return %arg0, %c0_i32 : i32, i32
  }
  func.func @transform_1(%arg0: i32) -> (i32, i32) {
    %c0_i32 = arith.constant 0 : i32
    %c0_i32_0 = arith.constant 0 : i32
    %c0_i32_1 = arith.constant 0 : i32
    return %c0_i32, %c0_i32_0 : i32, i32
  }
  func.func @transform_2(%arg0: i32) -> (i32, i32) {
    %c0_i32 = arith.constant 0 : i32
    %c0_i32_0 = arith.constant 0 : i32
    %c0_i32_1 = arith.constant 0 : i32
    return %c0_i32, %c0_i32_0 : i32, i32
  }
  func.func @transform_3(%arg0: i32) -> (i32, i32, i32) {
    %c0_i32 = arith.constant 0 : i32
    %c0_i32_0 = arith.constant 0 : i32
    %c0_i32_1 = arith.constant 0 : i32
    return %arg0, %c0_i32, %c0_i32_0 : i32, i32, i32
  }
}

</mosaic_0001>

<llo_original>
// kernel: tpu_custom_call.1
$region0: #{tpu_custom_call.1}
  #allocation0 [shape = 'u32[]', space=smem, size = 0x4, offset = 0x4, fixed_abs, tag = 'smem constant byte address 0x4 - core index']
  #allocation1 [shape = 'u32[72,128]{1,0:T(1,128)}', space=vmem, size = 0x9000, scoped, tag = 'internal scratch']
  #allocation2 [shape = 'f32[1,1]{1,0:T(1,128)S(6)}', space=smem, size = 0x200, scoped, tag = 'scoped memory for tpu_custom_call.1']
  %s0 = inlined_call_operand.hbm [shape: f32[20,32], index: 0, kind: input, shape index: {}]
  %s1 = inlined_call_operand.hbm [shape: f32[8,32], index: 1, kind: input, shape index: {}]
  %s2 = inlined_call_operand.<no memory space> [shape: f32[1,1], index: 2, kind: input, shape index: {}]
  %s3 = inlined_call_operand.hbm [shape: f32[3,1,8], index: 3, kind: output, shape index: {}]
  %s4 = sld [smem:[#allocation0]]
  $region53: #{tpu_custom_call.1} parent=0
    _
  %s6 = ssub.s32 1, %s4
  %s7 = scalar_select 0, %s6, %s4
  %8 = sst [smem:[#allocation2]] %s2
  $region1: #{tpu_custom_call.1} parent=0
    #allocation3 [shape = 'u8[8192]{0}', space=vmem, size = 0x2000, scoped, tag = 'input window, operand 0']
    #allocation4 [shape = 's32[2]{0}', space=sflag, size = 0x8, scoped, tag = 'scoped memory for tpu_custom_call.1']
    #allocation5 [shape = 's32[2]{0}', space=sflag, size = 0x8, scoped, tag = 'scoped memory for tpu_custom_call.1']
    #allocation6 [shape = 'u8[4096]{0}', space=vmem, size = 0x1000, scoped, tag = 'input window, operand 1, single buffered']
    #allocation7 [shape = 's32[1]{0}', space=sflag, size = 0x4, scoped, tag = 'scoped memory for tpu_custom_call.1']
    #allocation8 [shape = 'u8[1024]{0}', space=vmem, size = 0x400, scoped, tag = 'output window, operand 0']
    %9 = vsyncpa [#allocation4], 0
    %s10 = scalar_lea.sflag [#allocation4], 1
    %11 = vsyncpa %s10, 0
    %12 = vsyncpa [#allocation7], 0
    %13 = vsyncpa [#allocation5], 0
    %s14 = scalar_lea.sflag [#allocation5], 1
    %15 = vsyncpa %s14, 0
    loop: start=0, step=1, limit=5
    $region2: #{tpu_custom_call.1} parent=1 // loop_pre_header
      _
    $region3: #{tpu_custom_call.1} parent=1 // loop_header
      %s17 = sphi 0, %s21
      %p18 = scmp.ge.s32.totalorder %s17, 5
      %s27 = sphi 0, %s29
      %s30 = sphi 0, %s27
      %s31 = sphi 0, %s30
      %s47 = sphi 0, %s31
      %s51 = sphi 0, %s51
      %s53 = sphi 0, %s51
      %s54 = sphi 0, %s53
      %s68 = sphi 0, %s54
      %s72 = sphi 0, %s72
      %s74 = sphi 0, %s72
      %s75 = sphi 0, %s74
      %s89 = sphi 0, %s75
      %s95 = sphi 0, %s97
      %s98 = sphi 0, %s95
      %s99 = sphi 0, %s98
      %s115 = sphi 0, %s99
    $region4: #{tpu_custom_call.1} parent=1 // loop_header_branch
      %20 = sbr.rel (%p18) target = $region8
    $region5: #{tpu_custom_call.1} parent=1 // loop_body
      %s22 = ssub.s32 %s17, 1
      %s23 = ssub.s32 %s17, 2
      %s24 = sadd.s32 %s17, 1
      %s25 = ssub.s32 %s17, %s24
      %p26 = scmp.eq.s32.totalorder %s25, 0
      %s28 = sadd.s32 %s27, 1
      %s29 = scalar_select %p26, %s27, %s28
      %p32 = pneg %p26
      %p33 = scmp.eq.s32.totalorder %s17, 2
      %p34 = por %p32, %p33
      %p35 = scmp.ne.s32.totalorder %s27, %s30
      %p36 = scmp.eq.s32.totalorder %s17, 0
      %p37 = por %p35, %p36
      %p38 = scmp.ne.s32.totalorder %s27, %s30
      %p39 = scmp.eq.s32.totalorder %s22, 2
      %p40 = por %p38, %p39
      %p41 = scmp.ne.s32.totalorder %s30, %s31
      %p42 = scmp.eq.s32.totalorder %s22, 0
      %p43 = por %p41, %p42
      %p44 = scmp.ne.s32.totalorder %s30, %s31
      %p45 = scmp.eq.s32.totalorder %s23, 2
      %p46 = por %p44, %p45
      %p48 = scmp.ne.s32.totalorder %s31, %s47
      %p49 = scmp.eq.s32.totalorder %s23, 0
      %p50 = por %p48, %p49
      %s52 = sadd.s32 %s51, 1
      %p55 = scmp.eq.s32.totalorder %s17, 2
      %p56 = scmp.ne.s32.totalorder %s51, %s53
      %p57 = scmp.eq.s32.totalorder %s17, 0
      %p58 = por %p56, %p57
      %p59 = scmp.ne.s32.totalorder %s51, %s53
      %p60 = scmp.eq.s32.totalorder %s22, 2
      %p61 = por %p59, %p60
      %p62 = scmp.ne.s32.totalorder %s53, %s54
      %p63 = scmp.eq.s32.totalorder %s22, 0
      %p64 = por %p62, %p63
      %p65 = scmp.ne.s32.totalorder %s53, %s54
      %p66 = scmp.eq.s32.totalorder %s23, 2
      %p67 = por %p65, %p66
      %p69 = scmp.ne.s32.totalorder %s54, %s68
      %p70 = scmp.eq.s32.totalorder %s23, 0
      %p71 = por %p69, %p70
      %s73 = sadd.s32 %s72, 1
      %p76 = scmp.eq.s32.totalorder %s17, 2
      %p77 = scmp.ne.s32.totalorder %s72, %s74
      %p78 = scmp.eq.s32.totalorder %s17, 0
      %p79 = por %p77, %p78
      %p80 = scmp.ne.s32.totalorder %s72, %s74
      %p81 = scmp.eq.s32.totalorder %s22, 2
      %p82 = por %p80, %p81
      %p83 = scmp.ne.s32.totalorder %s74, %s75
      %p84 = scmp.eq.s32.totalorder %s22, 0
      %p85 = por %p83, %p84
      %p86 = scmp.ne.s32.totalorder %s74, %s75
      %p87 = scmp.eq.s32.totalorder %s23, 2
      %p88 = por %p86, %p87
      %p90 = scmp.ne.s32.totalorder %s75, %s89
      %p91 = scmp.eq.s32.totalorder %s23, 0
      %p92 = por %p90, %p91
      %s93 = ssub.s32 %s17, %s24
      %p94 = scmp.eq.s32.totalorder %s93, 0
      %s96 = sadd.s32 %s95, 1
      %s97 = scalar_select %p94, %s95, %s96
      %p100 = pneg %p94
      %p101 = scmp.eq.s32.totalorder %s17, 2
      %p102 = por %p100, %p101
      %p103 = scmp.ne.s32.totalorder %s95, %s98
      %p104 = scmp.eq.s32.totalorder %s17, 0
      %p105 = por %p103, %p104
      %p106 = scmp.ne.s32.totalorder %s95, %s98
      %p107 = scmp.eq.s32.totalorder %s22, 2
      %p108 = por %p106, %p107
      %p109 = scmp.ne.s32.totalorder %s98, %s99
      %p110 = scmp.eq.s32.totalorder %s22, 0
      %p111 = por %p109, %p110
      %p112 = scmp.ne.s32.totalorder %s98, %s99
      %p113 = scmp.eq.s32.totalorder %s23, 2
      %p114 = por %p112, %p113
      %p116 = scmp.ne.s32.totalorder %s99, %s115
      %p117 = scmp.eq.s32.totalorder %s23, 0
      %p118 = por %p116, %p117
      %p119 = scmp.le.s32.totalorder 1, %s17
      %p120 = scmp.lt.s32.totalorder %s17, 4
      %p121 = pnand %p119, %p120
      %p122 = pneg %p121
      // Predicated region
      $region9: #{tpu_custom_call.1} parent=5 // pred_check
        _
      $region10: #{tpu_custom_call.1} parent=5 // pred_check_branch
        %124 = sbr.rel (%p121) target = $region12
      $region11: #{tpu_custom_call.1} parent=5 // pred_region
        %s125 = ssub.s32 %s17, 1
        // Predicated region
        $region13: #{tpu_custom_call.1} parent=11 // pred_check
          %p126 = pneg %p64
        $region14: #{tpu_custom_call.1} parent=11 // pred_check_branch
          %128 = sbr.rel (%p126) target = $region16
        $region15: #{tpu_custom_call.1} parent=11 // pred_region
          %130 = vsyncadd [#allocation7], 0
          %s132 = sshll.u32 %s1, 4
          %s133 = int_to_ptr.hbm [resolvable:$true] %s132
          %s134 = sshll.u32 [#allocation6], 4
          %s135 = int_to_ptr.vmem [resolvable:$true] %s134
          %137 = dma.hbm_to_vmem [thread:$0]  %s133, 128, %s135, [#allocation7]
        $region16: #{tpu_custom_call.1} parent=11 // pred_fallthru
          _
        // Predicated region
        $region17: #{tpu_custom_call.1} parent=11 // pred_check
          %p138 = pneg %p85
        $region18: #{tpu_custom_call.1} parent=11 // pred_check_branch
          %140 = sbr.rel (%p138) target = $region20
        $region19: #{tpu_custom_call.1} parent=11 // pred_region
          _
        $region20: #{tpu_custom_call.1} parent=11 // pred_fallthru
          _
      $region12: #{tpu_custom_call.1} parent=5 // pred_fallthru
        _
      %p141 = scmp.lt.s32.totalorder %s17, 3
      // Predicated region
      $region21: #{tpu_custom_call.1} parent=5 // pred_check
        %p142 = pneg %p141
      $region22: #{tpu_custom_call.1} parent=5 // pred_check_branch
        %144 = sbr.rel (%p142) target = $region24
      $region23: #{tpu_custom_call.1} parent=5 // pred_region
        // Predicated region
        $region25: #{tpu_custom_call.1} parent=23 // pred_check
          %p145 = pneg %p37
        $region26: #{tpu_custom_call.1} parent=23 // pred_check_branch
          %147 = sbr.rel (%p145) target = $region28
        $region27: #{tpu_custom_call.1} parent=23 // pred_region
          %s148 = sand.u32 %s27, 1
          %s149 = scalar_lea.sflag [#allocation4], %s148
          %s150 = sand.u32 %s27, 1
          %s151 = smul.addr %s150, 8
          %s152 = scalar_lea.vmem [#allocation3], %s151
          %154 = vsyncadd %s149, 0
          %s155 = smul.addr %s17, 8
          %s156 = scalar_lea.hbm %s0, %s155
          %s158 = sshll.u32 %s156, 4
          %s159 = int_to_ptr.hbm [resolvable:$true] %s158
          %s160 = sshll.u32 %s152, 4
          %s161 = int_to_ptr.vmem [resolvable:$true] %s160
          %163 = dma.hbm_to_vmem [thread:$0]  %s159, 128, %s161, %s149
        $region28: #{tpu_custom_call.1} parent=23 // pred_fallthru
          _
      $region24: #{tpu_custom_call.1} parent=5 // pred_fallthru
        _
      %p164 = scmp.le.s32.totalorder 1, %s17
      %p165 = scmp.lt.s32.totalorder %s17, 4
      %p166 = pnand %p164, %p165
      %p167 = pneg %p166
      // Predicated region
      $region29: #{tpu_custom_call.1} parent=5 // pred_check
        _
      $region30: #{tpu_custom_call.1} parent=5 // pred_check_branch
        %169 = sbr.rel (%p166) target = $region32
      $region31: #{tpu_custom_call.1} parent=5 // pred_region
        %s170 = ssub.s32 %s17, 1
        %s171 = sand.u32 %s30, 1
        %s172 = scalar_lea.sflag [#allocation4], %s171
        %s173 = sand.u32 %s30, 1
        %s174 = smul.addr %s173, 8
        %s175 = scalar_lea.vmem [#allocation3], %s174
        // Predicated region
        $region33: #{tpu_custom_call.1} parent=31 // pred_check
          %p176 = pneg %p43
        $region34: #{tpu_custom_call.1} parent=31 // pred_check_branch
          %178 = sbr.rel (%p176) target = $region36
        $region35: #{tpu_custom_call.1} parent=31 // pred_region
          %180 = dma.done %s172, 128
        $region36: #{tpu_custom_call.1} parent=31 // pred_fallthru
          _
        // Predicated region
        $region37: #{tpu_custom_call.1} parent=31 // pred_check
          %p181 = pneg %p64
        $region38: #{tpu_custom_call.1} parent=31 // pred_check_branch
          %183 = sbr.rel (%p181) target = $region40
        $region39: #{tpu_custom_call.1} parent=31 // pred_region
          %185 = dma.done [#allocation7], 128
        $region40: #{tpu_custom_call.1} parent=31 // pred_fallthru
          _
        %s186 = sand.u32 %s30, 1
        %s187 = scalar_lea.sflag [#allocation4], %s186
        %s188 = sand.u32 %s30, 1
        %s189 = smul.addr %s188, 8
        %s190 = scalar_lea.vmem [#allocation3], %s189
        %p191 = pneg %p43
        %p192 = pneg %p40
        %p193 = pneg %p64
        %p194 = pneg %p61
        %p195 = pneg %p85
        %p196 = pneg %p82
        %p197 = pneg %p111
        %p198 = pneg %p108
        %s199 = sand.u32 %s98, 1
        %s200 = scalar_lea.sflag [#allocation5], %s199
        %s201 = sand.u32 %s98, 1
        %s202 = scalar_lea.vmem [#allocation8], %s201
        %v203 = vld [vmem:[%s175] sm:$0xff]
        %v204 = vld [vmem:[#allocation6] sm:$0xff]
        %vm205 = vcmask 261120
        %v207 = vsel %vm205, %v204, 0
        %v210 = vsel %vm205, %v203, 0
        %212 = vmatpush.xpose.msra.mxu0 0.0
        %213 = vmatpush.xpose.msra.mxu0 0.0
        %214 = vmatpush.xpose.msra.mxu0 0.0
        %215 = vmatpush.xpose.msra.mxu0 0.0
        %216 = vmatpush.xpose.msra.mxu0 0.0
        %217 = vmatpush.xpose.msra.mxu0 0.0
        %218 = vmatpush.xpose.msra.mxu0 0.0
        %219 = vmatpush.xpose.msra.mxu0 0.0
        %220 = vmatpush.xpose.msra.mxu0 0.0
        %221 = vmatpush.xpose.msra.mxu0 0.0
        %222 = vmatpush.xpose.msra.mxu0 0.0
        %223 = vmatpush.xpose.msra.mxu0 0.0
        %224 = vmatpush.xpose.msra.mxu0 0.0
        %225 = vmatpush.xpose.msra.mxu0 0.0
        %226 = vmatpush.xpose.msra.mxu0 0.0
        %227 = vmatpush.xpose.msra.mxu0 %v210
        %228 = vmatmul.f32.gmra.mxu0 %v207
        %v229 = vpop.f32.mrf.mxu0
        %v230 = vadd.f32 0.0, %v229
        %231 = vdwg.mxu0
        %s232 = sld [smem:[#allocation2]]
        %v233 = vstv %s232
        %v234 = vadd.f32 %v230, %v233
        %v235 = vxor.u32 %v234, 2147483648
        %v236 = vmul.f32 %v235, 1.442695
        %v237 = vpow.pop %v236
        %v238 = vadd.f32 %v237, 1.0
        %v239 = vrcp.pop %v238
        %v240 = vmul.f32 %v238, %v239
        %v241 = vsub.f32 1.0, %v240
        %v242 = vmul.f32 %v239, %v241
        %v243 = vadd.f32 %v239, %v242
        %vm244 = vweird.f32 %v238
        %vm245 = vweird.f32 %v239
        %vm246 = vmor %vm244, %vm245
        %v247 = vsel %vm246, %v239, %v243
        %v248 = vand.u32 2147483647, %v238
        %vm249 = vcmp.eq.f32.partialorder %v248, 8.507059e+37
        %v250 = vand.u32 %v238, 2147483648
        %v251 = vor.u32 1.1754944e-38, %v250
        %v252 = vsel %vm249, %v251, %v247
        %v253 = vmul.f32 1.0, %v252
        %vm254 = vcmask 57344
        %255 = vst.msk [vmem:[%s202] sm:$0x1] %vm254, %v253
        %s256 = sand.u32 %s98, 1
        %s257 = scalar_lea.sflag [#allocation5], %s256
        %s258 = sand.u32 %s98, 1
        %s259 = scalar_lea.vmem [#allocation8], %s258
        // Predicated region
        $region41: #{tpu_custom_call.1} parent=31 // pred_check
          %p260 = pneg %p108
        $region42: #{tpu_custom_call.1} parent=31 // pred_check_branch
          %262 = sbr.rel (%p260) target = $region44
        $region43: #{tpu_custom_call.1} parent=31 // pred_region
          %264 = vsyncadd %s257, 0
          %s265 = scalar_lea.hbm %s3, %s22
          %s267 = sshll.u32 %s259, 4
          %s268 = int_to_ptr.vmem [resolvable:$true] %s267
          %s269 = sshll.u32 %s265, 4
          %s270 = int_to_ptr.hbm [resolvable:$true] %s269
          %272 = dma.vmem_to_hbm [thread:$0]  %s268, 16, %s270, %s257
        $region44: #{tpu_custom_call.1} parent=31 // pred_fallthru
          _
      $region32: #{tpu_custom_call.1} parent=5 // pred_fallthru
        _
      %p273 = scmp.le.s32.totalorder 2, %s17
      // Predicated region
      $region45: #{tpu_custom_call.1} parent=5 // pred_check
        %p274 = pneg %p273
      $region46: #{tpu_custom_call.1} parent=5 // pred_check_branch
        %276 = sbr.rel (%p274) target = $region48
      $region47: #{tpu_custom_call.1} parent=5 // pred_region
        %s277 = ssub.s32 %s17, 2
        // Predicated region
        $region49: #{tpu_custom_call.1} parent=47 // pred_check
          %p278 = pneg %p114
        $region50: #{tpu_custom_call.1} parent=47 // pred_check_branch
          %280 = sbr.rel (%p278) target = $region52
        $region51: #{tpu_custom_call.1} parent=47 // pred_region
          %s281 = sand.u32 %s99, 1
          %s282 = scalar_lea.sflag [#allocation5], %s281
          %s283 = sand.u32 %s99, 1
          %s284 = scalar_lea.vmem [#allocation8], %s283
          %286 = dma.done %s282, 16
        $region52: #{tpu_custom_call.1} parent=47 // pred_fallthru
          _
      $region48: #{tpu_custom_call.1} parent=5 // pred_fallthru
        _
    $region6: #{tpu_custom_call.1} parent=1 // loop_footer
      %s21 = sadd.s32 1, %s17
    $region7: #{tpu_custom_call.1} parent=1 // loop_footer_branch
      %16 = sbr.rel target = $region3
    $region8: #{tpu_custom_call.1} parent=1 // loop_exit
      _
    %287 = vsyncpa [#allocation4], 1
    %s288 = scalar_lea.sflag [#allocation4], 1
    %289 = vsyncpa %s288, 1
    %290 = vsyncpa [#allocation7], 1
    %291 = vsyncpa [#allocation5], 1
    %s292 = scalar_lea.sflag [#allocation5], 1
    %293 = vsyncpa %s292, 1

</llo_original>
